<compile_context>
chip_gen: v6e
topology: v6e:2x2x1
jax: 0.10.0
libtpu: 0.0.40
codegen_flags: <defaults>
</compile_context>

<pallas_src>
import numpy as np
import jax
import jax.numpy as jnp
from jax import lax
from jax.experimental import pallas as pl
from jax.experimental.pallas import tpu as pltpu

EPS = 1e-5


# ------------------------------ Pallas kernel -------------------------------

def _channel_fuse_kernel(x_ref, w_ref, b_ref, o_ref):
    """One (TB, TL) tile per grid step.

    x_ref : (TB, Cin, TL)   input tile  (channels on sublanes, length on lanes)
    w_ref : (Cout, Cin)     BN-folded 1x1-conv weight (whole array)
    b_ref : (Cout, 1)       BN-folded bias
    o_ref : (TB, Cout, TL)  output tile
    """
    TB, Cout, TL = o_ref.shape
    w = w_ref[...]
    # Hoisted out of the batch loop: JAX does not CSE broadcast_in_dim.
    bias = jnp.broadcast_to(b_ref[...], (Cout, TL))

    def body(b, carry):
        # 1x1 Conv1d + folded BN == channel matmul on the MXU.
        y = jnp.dot(w, x_ref[b], preferred_element_type=jnp.float32) + bias
        # h_swish: y * relu6(y + 3) / 6
        o_ref[b] = (y * (jnp.clip(y + 3.0, 0.0, 6.0) * (1.0 / 6.0))).astype(o_ref.dtype)
        return carry

    # Short, fully unrolled inner loop (TB is small) -> LLO scheduler visibility.
    lax.fori_loop(0, TB, body, 0, unroll=True)


# ------------------------------ tile selection -------------------------------

def _round_up(x, m):
    return ((x + m - 1) // m) * m


def _choose_tiles(B, L, C_in, C_out, *, target_bytes=2 << 20, max_tb=16, max_tl=2048):
    """Pick (TB, TL) so each grid step moves ~target_bytes of in+out traffic,
    stores stay lane-dense (TL multiple of 128), and there are enough grid
    steps for pipeline overlap / v7x megacore sharding."""
    Lp = _round_up(L, 128)          # lane-dense
    TL = min(Lp, max_tl)
    Lp = _round_up(Lp, TL)          # every L tile is full

    per_batch_bytes = TL * (C_in + C_out) * 4
    tb_cap = int(max(1, min(B, max_tb, target_bytes // per_batch_bytes)))
    TB = 1 << (tb_cap.bit_length() - 1)          # power of two -> cheap padding
    # Keep >= 4 total grid steps when B allows (pipeline overlap, >=2 steps/TC on v7x).
    while TB > 1 and (-(-B // TB)) * (Lp // TL) < 4:
        TB //= 2
    Bp = _round_up(B, TB)
    return TB, TL, Bp, Lp


# ------------------------------ host wrapper --------------------------------

def channel_fuse_forward(x, w_eff, b_eff):
    """x: (B, Cin, L) f32; w_eff: (Cout, Cin); b_eff: (Cout, 1)."""
    B, C_in, L = x.shape
    C_out = w_eff.shape[0]
    TB, TL, Bp, Lp = _choose_tiles(B, L, C_in, C_out)

    # Zero-pad batch / length so every block is full and stores stay unmasked;
    # padded rows/positions are exact no-ops for a 1x1 conv and sliced off below.
    if (Bp, Lp) != (B, L):
        x = jnp.pad(x, ((0, Bp - B), (0, 0), (0, Lp - L)))

    grid = (Bp // TB, Lp // TL)
    out = pl.pallas_call(
        _channel_fuse_kernel,
        out_shape=jax.ShapeDtypeStruct((Bp, C_out, Lp), jnp.float32),
        grid=grid,
        in_specs=[
            pl.BlockSpec((TB, C_in, TL), lambda bi, li: (bi, 0, li)),
            pl.BlockSpec((C_out, C_in), lambda bi, li: (0, 0)),
            pl.BlockSpec((C_out, 1), lambda bi, li: (0, 0)),
        ],
        out_specs=pl.BlockSpec((TB, C_out, TL), lambda bi, li: (bi, 0, li)),
        compiler_params=pltpu.CompilerParams(
            dimension_semantics=("parallel", "parallel")),
    )(x, w_eff, b_eff)

    if (Bp, Lp) != (B, L):
        out = out[:B, :, :L]
    return out


# -------------------------- parameter construction --------------------------

def make_params(in_chan, num_feature, seed=0):
    """Deterministic synthetic parameters.

    Returns (raw, folded):
      raw    : PyTorch-shaped params (for the numpy reference)
      folded : eval-mode BN folded into the conv weight/bias (kernel-ready)
    """
    rng = np.random.RandomState(seed)

    w_conv = (0.2 * rng.randn(num_feature, in_chan, 1)).astype(np.float32)
    b_conv = (0.1 * rng.randn(num_feature)).astype(np.float32)

    gamma = (1.0 + 0.1 * rng.randn(num_feature)).astype(np.float32)
    beta = (0.1 * rng.randn(num_feature)).astype(np.float32)
    mean = (0.1 * rng.randn(num_feature)).astype(np.float32)
    var = rng.uniform(0.5, 1.5, size=num_feature).astype(np.float32)

    raw = dict(w=w_conv, b=b_conv, gamma=gamma, beta=beta, mean=mean, var=var)

    # Fold eval-mode BatchNorm1d into the 1x1 conv (exact, BN is affine):
    #   bn(y) = s * y + (beta - s * mean),  s = gamma / sqrt(var + eps)
    s = gamma / np.sqrt(var + EPS)
    w_eff = (s[:, None] * w_conv[:, :, 0]).astype(np.float32)          # (Cout, Cin)
    b_eff = (s * (b_conv - mean) + beta).astype(np.float32)            # (Cout,)

    folded = dict(w=jnp.asarray(w_eff),
                  b=jnp.asarray(b_eff.reshape(-1, 1)))
    return raw, folded


# ----------------------------- numpy reference ------------------------------

def reference_forward(x, raw):
    x = np.asarray(x, np.float32)
    # Conv1d kernel_size=1
    y = np.einsum('oi,bil->bol', raw["w"][:, :, 0], x) + raw["b"][None, :, None]
    # BatchNorm1d (eval)
    y = (y - raw["mean"][None, :, None]) / np.sqrt(raw["var"][None, :, None] + EPS)
    y = y * raw["gamma"][None, :, None] + raw["beta"][None, :, None]
    # h_swish
    return y * np.clip(y + 3.0, 0.0, 6.0) / 6.0


# ---------------------------------- main -------------------------------------

if __name__ == "__main__":
    # Small shapes; L=500 and B=3 deliberately exercise the pad/slice path,
    # the tile chooser still produces lane-dense 128-multiple L tiles.
    B, in_chan, num_feature, L = 3, 8, 16, 500

    raw, folded = make_params(in_chan, num_feature, seed=0)
    x = jax.random.normal(jax.random.PRNGKey(0), (B, in_chan, L), dtype=jnp.float32)

    q = jax.block_until_ready(channel_fuse_forward(x, folded["w"], folded["b"]))

    ref = reference_forward(np.asarray(x), raw)
    assert q.shape == (B, num_feature, L)
    err = float(np.max(np.abs(np.asarray(q) - ref)))
    assert np.allclose(np.asarray(q), ref, rtol=1e-4, atol=1e-4), err

    print("KERNEL_OK")
</pallas_src>

<mosaic_0001>
module attributes {stable_mosaic.version = 11 : i64} {
  func.func @_channel_fuse_kernel(%arg0: i32, %arg1: i32, %arg2: memref<1x8x512xf32, #tpu.memory_space<vmem>>, %arg3: memref<16x8xf32, #tpu.memory_space<vmem>>, %arg4: memref<16x1xf32, #tpu.memory_space<vmem>>, %arg5: memref<1x16x512xf32, #tpu.memory_space<vmem>>) attributes {dimension_semantics = [#tpu.dimension_semantics<parallel>, #tpu.dimension_semantics<parallel>], iteration_bounds = array<i64: 3, 1>, scalar_prefetch = 0 : i64, scratch_operands = 0 : i64, tpu.core_type = #tpu.core_type<tc>, window_params = [{transform_indices = @transform_0, window_bounds = array<i64: 1, 8, 512>}, {pipeline_mode = #tpu.pipeline_mode<synchronous>, transform_indices = @transform_1, window_bounds = array<i64: 16, 8>}, {pipeline_mode = #tpu.pipeline_mode<synchronous>, transform_indices = @transform_2, window_bounds = array<i64: 16, 1>}, {transform_indices = @transform_3, window_bounds = array<i64: 1, 16, 512>}]} {
    %c0 = arith.constant 0 : index
    %c0_0 = arith.constant 0 : index
    %0 = vector.load %arg3[%c0, %c0_0] : memref<16x8xf32, #tpu.memory_space<vmem>>, vector<16x8xf32>
    %c0_1 = arith.constant 0 : index
    %c0_2 = arith.constant 0 : index
    %1 = vector.load %arg4[%c0_1, %c0_2] : memref<16x1xf32, #tpu.memory_space<vmem>>, vector<16x1xf32>
    %2 = vector.shape_cast %1 : vector<16x1xf32> to vector<16x1xf32>
    %3 = vector.broadcast %2 : vector<16x1xf32> to vector<16x512xf32>
    %c0_i32 = arith.constant 0 : i32
    %4 = arith.index_cast %c0_i32 : i32 to index
    %c0_3 = arith.constant 0 : index
    %c0_4 = arith.constant 0 : index
    %5 = vector.load %arg2[%4, %c0_3, %c0_4] : memref<1x8x512xf32, #tpu.memory_space<vmem>>, vector<1x8x512xf32>
    %6 = vector.shape_cast %5 : vector<1x8x512xf32> to vector<8x512xf32>
    %cst = arith.constant dense<0.000000e+00> : vector<16x512xf32>
    %7 = tpu.matmul %0, %6, %cst {dimension_numbers = #tpu.dot_dimension_numbers<[1], [0], [0], [1], [0, 0, 1, 1], [], []>} : vector<16x8xf32>, vector<8x512xf32>, vector<16x512xf32> -> vector<16x512xf32>
    %8 = arith.addf %7, %3 : vector<16x512xf32>
    %cst_5 = arith.constant 3.000000e+00 : f32
    %9 = vector.broadcast %cst_5 : f32 to vector<16x512xf32>
    %10 = arith.addf %8, %9 : vector<16x512xf32>
    %cst_6 = arith.constant 0.000000e+00 : f32
    %cst_7 = arith.constant 6.000000e+00 : f32
    %11 = vector.broadcast %cst_6 : f32 to vector<16x512xf32>
    %12 = arith.maximumf %11, %10 : vector<16x512xf32>
    %13 = vector.broadcast %cst_7 : f32 to vector<16x512xf32>
    %14 = arith.minimumf %13, %12 : vector<16x512xf32>
    %cst_8 = arith.constant 0.166666672 : f32
    %15 = vector.broadcast %cst_8 : f32 to vector<16x512xf32>
    %16 = arith.mulf %14, %15 : vector<16x512xf32>
    %17 = arith.mulf %8, %16 : vector<16x512xf32>
    %18 = arith.index_cast %c0_i32 : i32 to index
    %c0_9 = arith.constant 0 : index
    %c0_10 = arith.constant 0 : index
    %19 = vector.load %arg5[%18, %c0_9, %c0_10] : memref<1x16x512xf32, #tpu.memory_space<vmem>>, vector<1x16x512xf32>
    %20 = vector.shape_cast %19 : vector<1x16x512xf32> to vector<16x512xf32>
    %21 = vector.shape_cast %17 : vector<16x512xf32> to vector<1x16x512xf32>
    tpu.vector_store %arg5[%18, %c0_9, %c0_10], %21 {strides = array<i32>} : memref<1x16x512xf32, #tpu.memory_space<vmem>>, vector<1x16x512xf32>,
    %c1_i32 = arith.constant 1 : i32
    return
  }
  func.func @transform_0(%arg0: i32, %arg1: i32) -> (i32, i32, i32) {
    %c0_i32 = arith.constant 0 : i32
    %c0_i32_0 = arith.constant 0 : i32
    return %arg0, %c0_i32, %arg1 : i32, i32, i32
  }
  func.func @transform_1(%arg0: i32, %arg1: i32) -> (i32, i32) {
    %c0_i32 = arith.constant 0 : i32
    %c0_i32_0 = arith.constant 0 : i32
    %c0_i32_1 = arith.constant 0 : i32
    return %c0_i32, %c0_i32_0 : i32, i32
  }
  func.func @transform_2(%arg0: i32, %arg1: i32) -> (i32, i32) {
    %c0_i32 = arith.constant 0 : i32
    %c0_i32_0 = arith.constant 0 : i32
    %c0_i32_1 = arith.constant 0 : i32
    return %c0_i32, %c0_i32_0 : i32, i32
  }
  func.func @transform_3(%arg0: i32, %arg1: i32) -> (i32, i32, i32) {
    %c0_i32 = arith.constant 0 : i32
    %c0_i32_0 = arith.constant 0 : i32
    return %arg0, %c0_i32, %arg1 : i32, i32, i32
  }
}

</mosaic_0001>

<llo_original>
// kernel: tpu_custom_call.1
$region0: #{tpu_custom_call.1}
  #allocation0 [shape = 'u32[]', space=smem, size = 0x4, offset = 0x4, fixed_abs, tag = 'smem constant byte address 0x4 - core index']
  #allocation1 [shape = 'u32[144,128]{1,0:T(1,128)}', space=vmem, size = 0x12000, scoped, tag = 'internal scratch']
  %s0 = inlined_call_operand.hbm [shape: f32[3,8,512], index: 0, kind: input, shape index: {}]
  %s1 = inlined_call_operand.vmem [shape: f32[16,8], index: 1, kind: input, shape index: {}]
  %s2 = inlined_call_operand.vmem [shape: f32[16,1], index: 2, kind: input, shape index: {}]
  %s3 = inlined_call_operand.hbm [shape: f32[3,16,512], index: 3, kind: output, shape index: {}]
  %s4 = sld [smem:[#allocation0]]
  $region49: #{tpu_custom_call.1} parent=0
    _
  %s6 = ssub.s32 1, %s4
  %s7 = scalar_select 0, %s6, %s4
  $region1: #{tpu_custom_call.1} parent=0
    #allocation2 [shape = 'u8[32768]{0}', space=vmem, size = 0x8000, scoped, tag = 'input window, operand 0']
    #allocation3 [shape = 's32[2]{0}', space=sflag, size = 0x8, scoped, tag = 'scoped memory for tpu_custom_call.1']
    #allocation4 [shape = 's32[2]{0}', space=sflag, size = 0x8, scoped, tag = 'scoped memory for tpu_custom_call.1']
    #allocation5 [shape = 'u8[65536]{0}', space=vmem, size = 0x10000, scoped, tag = 'output window, operand 0']
    %8 = vsyncpa [#allocation3], 0
    %s9 = scalar_lea.sflag [#allocation3], 1
    %10 = vsyncpa %s9, 0
    %11 = vsyncpa [#allocation4], 0
    %s12 = scalar_lea.sflag [#allocation4], 1
    %13 = vsyncpa %s12, 0
    loop: start=0, step=1, limit=5
    $region2: #{tpu_custom_call.1} parent=1 // loop_pre_header
      _
    $region3: #{tpu_custom_call.1} parent=1 // loop_header
      %s15 = sphi 0, %s19
      %p16 = scmp.ge.s32.totalorder %s15, 5
      %s22 = sphi 0, %s34
      %s23 = sphi 0, %s30
      %s24 = sphi 0, %s22
      %s25 = sphi 0, %s23
      %s26 = sphi 0, %s24
      %s27 = sphi 0, %s25
      %s39 = sphi 0, %s41
      %s42 = sphi 0, %s39
      %s43 = sphi 0, %s42
      %s59 = sphi 0, %s43
      %s63 = sphi 0, %s63
      %s65 = sphi 0, %s63
      %s66 = sphi 0, %s65
      %s80 = sphi 0, %s66
      %s84 = sphi 0, %s84
      %s86 = sphi 0, %s84
      %s87 = sphi 0, %s86
      %s101 = sphi 0, %s87
      %s109 = sphi 0, %s111
      %s112 = sphi 0, %s109
      %s113 = sphi 0, %s112
      %s129 = sphi 0, %s113
    $region4: #{tpu_custom_call.1} parent=1 // loop_header_branch
      %18 = sbr.rel (%p16) target = $region8
    $region5: #{tpu_custom_call.1} parent=1 // loop_body
      %s20 = ssub.s32 %s15, 1
      %s21 = ssub.s32 %s15, 2
      %s28 = sadd.s32 1, %s23
      %p29 = scmp.ge.s32.totalorder %s28, 1
      %s30 = scalar_select %p29, 0, %s28
      %s31 = sadd.s32 1, %s22
      %s32 = scalar_select %p29, %s31, %s22
      %p33 = scmp.ge.s32.totalorder %s32, 3
      %s34 = scalar_select %p33, 0, %s32
      %s35 = ssub.s32 %s22, %s34
      %s36 = ssub.s32 %s23, %s30
      %s37 = sor.u32 %s35, %s36
      %p38 = scmp.eq.s32.totalorder %s37, 0
      %s40 = sadd.s32 %s39, 1
      %s41 = scalar_select %p38, %s39, %s40
      %p44 = pneg %p38
      %p45 = scmp.eq.s32.totalorder %s15, 2
      %p46 = por %p44, %p45
      %p47 = scmp.ne.s32.totalorder %s39, %s42
      %p48 = scmp.eq.s32.totalorder %s15, 0
      %p49 = por %p47, %p48
      %p50 = scmp.ne.s32.totalorder %s39, %s42
      %p51 = scmp.eq.s32.totalorder %s20, 2
      %p52 = por %p50, %p51
      %p53 = scmp.ne.s32.totalorder %s42, %s43
      %p54 = scmp.eq.s32.totalorder %s20, 0
      %p55 = por %p53, %p54
      %p56 = scmp.ne.s32.totalorder %s42, %s43
      %p57 = scmp.eq.s32.totalorder %s21, 2
      %p58 = por %p56, %p57
      %p60 = scmp.ne.s32.totalorder %s43, %s59
      %p61 = scmp.eq.s32.totalorder %s21, 0
      %p62 = por %p60, %p61
      %s64 = sadd.s32 %s63, 1
      %p67 = scmp.eq.s32.totalorder %s15, 2
      %p68 = scmp.ne.s32.totalorder %s63, %s65
      %p69 = scmp.eq.s32.totalorder %s15, 0
      %p70 = por %p68, %p69
      %p71 = scmp.ne.s32.totalorder %s63, %s65
      %p72 = scmp.eq.s32.totalorder %s20, 2
      %p73 = por %p71, %p72
      %p74 = scmp.ne.s32.totalorder %s65, %s66
      %p75 = scmp.eq.s32.totalorder %s20, 0
      %p76 = por %p74, %p75
      %p77 = scmp.ne.s32.totalorder %s65, %s66
      %p78 = scmp.eq.s32.totalorder %s21, 2
      %p79 = por %p77, %p78
      %p81 = scmp.ne.s32.totalorder %s66, %s80
      %p82 = scmp.eq.s32.totalorder %s21, 0
      %p83 = por %p81, %p82
      %s85 = sadd.s32 %s84, 1
      %p88 = scmp.eq.s32.totalorder %s15, 2
      %p89 = scmp.ne.s32.totalorder %s84, %s86
      %p90 = scmp.eq.s32.totalorder %s15, 0
      %p91 = por %p89, %p90
      %p92 = scmp.ne.s32.totalorder %s84, %s86
      %p93 = scmp.eq.s32.totalorder %s20, 2
      %p94 = por %p92, %p93
      %p95 = scmp.ne.s32.totalorder %s86, %s87
      %p96 = scmp.eq.s32.totalorder %s20, 0
      %p97 = por %p95, %p96
      %p98 = scmp.ne.s32.totalorder %s86, %s87
      %p99 = scmp.eq.s32.totalorder %s21, 2
      %p100 = por %p98, %p99
      %p102 = scmp.ne.s32.totalorder %s87, %s101
      %p103 = scmp.eq.s32.totalorder %s21, 0
      %p104 = por %p102, %p103
      %s105 = ssub.s32 %s22, %s34
      %s106 = ssub.s32 %s23, %s30
      %s107 = sor.u32 %s105, %s106
      %p108 = scmp.eq.s32.totalorder %s107, 0
      %s110 = sadd.s32 %s109, 1
      %s111 = scalar_select %p108, %s109, %s110
      %p114 = pneg %p108
      %p115 = scmp.eq.s32.totalorder %s15, 2
      %p116 = por %p114, %p115
      %p117 = scmp.ne.s32.totalorder %s109, %s112
      %p118 = scmp.eq.s32.totalorder %s15, 0
      %p119 = por %p117, %p118
      %p120 = scmp.ne.s32.totalorder %s109, %s112
      %p121 = scmp.eq.s32.totalorder %s20, 2
      %p122 = por %p120, %p121
      %p123 = scmp.ne.s32.totalorder %s112, %s113
      %p124 = scmp.eq.s32.totalorder %s20, 0
      %p125 = por %p123, %p124
      %p126 = scmp.ne.s32.totalorder %s112, %s113
      %p127 = scmp.eq.s32.totalorder %s21, 2
      %p128 = por %p126, %p127
      %p130 = scmp.ne.s32.totalorder %s113, %s129
      %p131 = scmp.eq.s32.totalorder %s21, 0
      %p132 = por %p130, %p131
      %p133 = scmp.le.s32.totalorder 1, %s15
      %p134 = scmp.lt.s32.totalorder %s15, 4
      %p135 = pnand %p133, %p134
      %p136 = pneg %p135
      // Predicated region
      $region9: #{tpu_custom_call.1} parent=5 // pred_check
        _
      $region10: #{tpu_custom_call.1} parent=5 // pred_check_branch
        %138 = sbr.rel (%p135) target = $region12
      $region11: #{tpu_custom_call.1} parent=5 // pred_region
        %s139 = ssub.s32 %s15, 1
        // Predicated region
        $region13: #{tpu_custom_call.1} parent=11 // pred_check
          %p140 = pneg %p76
        $region14: #{tpu_custom_call.1} parent=11 // pred_check_branch
          %142 = sbr.rel (%p140) target = $region16
        $region15: #{tpu_custom_call.1} parent=11 // pred_region
          _
        $region16: #{tpu_custom_call.1} parent=11 // pred_fallthru
          _
        // Predicated region
        $region17: #{tpu_custom_call.1} parent=11 // pred_check
          %p143 = pneg %p97
        $region18: #{tpu_custom_call.1} parent=11 // pred_check_branch
          %145 = sbr.rel (%p143) target = $region20
        $region19: #{tpu_custom_call.1} parent=11 // pred_region
          _
        $region20: #{tpu_custom_call.1} parent=11 // pred_fallthru
          _
      $region12: #{tpu_custom_call.1} parent=5 // pred_fallthru
        _
      %p146 = scmp.lt.s32.totalorder %s15, 3
      // Predicated region
      $region21: #{tpu_custom_call.1} parent=5 // pred_check
        %p147 = pneg %p146
      $region22: #{tpu_custom_call.1} parent=5 // pred_check_branch
        %149 = sbr.rel (%p147) target = $region24
      $region23: #{tpu_custom_call.1} parent=5 // pred_region
        // Predicated region
        $region25: #{tpu_custom_call.1} parent=23 // pred_check
          %p150 = pneg %p49
        $region26: #{tpu_custom_call.1} parent=23 // pred_check_branch
          %152 = sbr.rel (%p150) target = $region28
        $region27: #{tpu_custom_call.1} parent=23 // pred_region
          %s153 = sand.u32 %s39, 1
          %s154 = scalar_lea.sflag [#allocation3], %s153
          %s155 = sand.u32 %s39, 1
          %s156 = smul.addr %s155, 32
          %s157 = scalar_lea.vmem [#allocation2], %s156
          %s158 = smul.u32 4, %s23
          %s160 = ssub.s32 512, 512
          %161 = vsyncadd %s154, %s160
          %s162 = smul.addr %s22, 4
          %s163 = sadd.s32 %s158, %s162
          %s164 = smul.addr %s163, 128
          %s165 = scalar_lea.hbm %s0, %s164
          %s167 = sshll.u32 %s157, 4
          %s168 = int_to_ptr.vmem [resolvable:$true] %s167
          %170 = dma.hbm_to_vmem [thread:$0]  %s165, 512, %s168, %s154
        $region28: #{tpu_custom_call.1} parent=23 // pred_fallthru
          _
      $region24: #{tpu_custom_call.1} parent=5 // pred_fallthru
        _
      %p171 = scmp.le.s32.totalorder 1, %s15
      %p172 = scmp.lt.s32.totalorder %s15, 4
      %p173 = pnand %p171, %p172
      %p174 = pneg %p173
      // Predicated region
      $region29: #{tpu_custom_call.1} parent=5 // pred_check
        _
      $region30: #{tpu_custom_call.1} parent=5 // pred_check_branch
        %176 = sbr.rel (%p173) target = $region32
      $region31: #{tpu_custom_call.1} parent=5 // pred_region
        %s177 = ssub.s32 %s15, 1
        %s178 = sand.u32 %s42, 1
        %s179 = scalar_lea.sflag [#allocation3], %s178
        %s180 = sand.u32 %s42, 1
        %s181 = smul.addr %s180, 32
        %s182 = scalar_lea.vmem [#allocation2], %s181
        // Predicated region
        $region33: #{tpu_custom_call.1} parent=31 // pred_check
          %p183 = pneg %p55
        $region34: #{tpu_custom_call.1} parent=31 // pred_check_branch
          %185 = sbr.rel (%p183) target = $region36
        $region35: #{tpu_custom_call.1} parent=31 // pred_region
          %186 = dma.done %s179, 512
        $region36: #{tpu_custom_call.1} parent=31 // pred_fallthru
          _
        %s187 = sand.u32 %s42, 1
        %s188 = scalar_lea.sflag [#allocation3], %s187
        %s189 = sand.u32 %s42, 1
        %s190 = smul.addr %s189, 32
        %s191 = scalar_lea.vmem [#allocation2], %s190
        %p192 = pneg %p55
        %p193 = pneg %p52
        %p194 = pneg %p76
        %p195 = pneg %p73
        %p196 = pneg %p97
        %p197 = pneg %p94
        %p198 = pneg %p125
        %p199 = pneg %p122
        %s200 = sand.u32 %s112, 1
        %s201 = scalar_lea.sflag [#allocation4], %s200
        %s202 = sand.u32 %s112, 1
        %s203 = smul.addr %s202, 64
        %s204 = scalar_lea.vmem [#allocation5], %s203
        %s205 = smul.u32 4, %s25
        %s206 = smul.u32 4, %s25
        %v207 = vld [vmem:[%s1] sm:$0xff]
        %v208 = vld [vmem:[%s1 + $0x8] sm:$0xff]
        %v209 = vld [vmem:[%s2] sm:$0xff]
        %v210 = vld [vmem:[%s2 + $0x8] sm:$0xff]
        %212 = vset.pattern.permute.xlu0 0
        %213 = vperm.xlu0 %212, %v209
        %v214 = vpop.permute.xlu0 %213
        %217 = vset.pattern.permute.xlu0 0
        %218 = vperm.xlu0 %217, %v210
        %v219 = vpop.permute.xlu0 %218
        %v221 = vld [vmem:[%s182] sm:$0xff]
        %v222 = vld [vmem:[%s182 + $0x8] sm:$0xff]
        %v223 = vld [vmem:[%s182 + $0x10] sm:$0xff]
        %v224 = vld [vmem:[%s182 + $0x18] sm:$0xff]
        %vm225 = vcmask 64512
        %v227 = vsel %vm225, %v207, 0
        %v230 = vsel %vm225, %v208, 0
        %232 = vmatprep.subr.mxu0 0.0
        %233 = vmatpush1.msra.mxu0 0.0
        %234 = vmatprep.subr.mxu0 0.0
        %235 = vmatpush1.msra.mxu0 0.0
        %236 = vmatprep.subr.mxu0 0.0
        %237 = vmatpush1.msra.mxu0 0.0
        %238 = vmatprep.subr.mxu0 0.0
        %239 = vmatpush1.msra.mxu0 0.0
        %240 = vmatprep.subr.mxu0 0.0
        %241 = vmatpush1.msra.mxu0 0.0
        %242 = vmatprep.subr.mxu0 0.0
        %243 = vmatpush1.msra.mxu0 0.0
        %244 = vmatprep.subr.mxu0 0.0
        %245 = vmatpush1.msra.mxu0 0.0
        %246 = vmatprep.subr.mxu0 0.0
        %247 = vmatpush1.msra.mxu0 0.0
        %248 = vmatprep.subr.mxu0 0.0
        %249 = vmatpush1.msra.mxu0 0.0
        %250 = vmatprep.subr.mxu0 0.0
        %251 = vmatpush1.msra.mxu0 0.0
        %252 = vmatprep.subr.mxu0 0.0
        %253 = vmatpush1.msra.mxu0 0.0
        %254 = vmatprep.subr.mxu0 0.0
        %255 = vmatpush1.msra.mxu0 0.0
        %256 = vmatprep.subr.mxu0 0.0
        %257 = vmatpush1.msra.mxu0 0.0
        %258 = vmatprep.subr.mxu0 0.0
        %259 = vmatpush1.msra.mxu0 0.0
        %260 = vmatprep.subr.mxu0 0.0
        %261 = vmatpush1.msra.mxu0 0.0
        %262 = vmatprep.subr.mxu0 %v222
        %263 = vmatpush1.msra.mxu0 %v221
        %264 = vmatprep.subr.mxu0 0.0
        %265 = vmatpush2.msra.mxu0 0.0
        %266 = vmatprep.subr.mxu0 0.0
        %267 = vmatpush2.msra.mxu0 0.0
        %268 = vmatprep.subr.mxu0 0.0
        %269 = vmatpush2.msra.mxu0 0.0
        %270 = vmatprep.subr.mxu0 0.0
        %271 = vmatpush2.msra.mxu0 0.0
        %272 = vmatprep.subr.mxu0 0.0
        %273 = vmatpush2.msra.mxu0 0.0
        %274 = vmatprep.subr.mxu0 0.0
        %275 = vmatpush2.msra.mxu0 0.0
        %276 = vmatprep.subr.mxu0 0.0
        %277 = vmatpush2.msra.mxu0 0.0
        %278 = vmatprep.subr.mxu0 0.0
        %279 = vmatpush2.msra.mxu0 0.0
        %280 = vmatprep.subr.mxu0 0.0
        %281 = vmatpush2.msra.mxu0 0.0
        %282 = vmatprep.subr.mxu0 0.0
        %283 = vmatpush2.msra.mxu0 0.0
        %284 = vmatprep.subr.mxu0 0.0
        %285 = vmatpush2.msra.mxu0 0.0
        %286 = vmatprep.subr.mxu0 0.0
        %287 = vmatpush2.msra.mxu0 0.0
        %288 = vmatprep.subr.mxu0 0.0
        %289 = vmatpush2.msra.mxu0 0.0
        %290 = vmatprep.subr.mxu0 0.0
        %291 = vmatpush2.msra.mxu0 0.0
        %292 = vmatprep.subr.mxu0 0.0
        %293 = vmatpush2.msra.mxu0 0.0
        %294 = vmatprep.subr.mxu0 0.0
        %295 = vmatpush2.msra.mxu0 0.0
        %296 = vmatprep.mubr.f32.mxu0 0.0
        %297 = vmatmul.mubr.f32.gmra.mxu0 %v227
        %v298 = vpop.f32.mrf.mxu0
        %v299 = vadd.f32 %v214, %v298
        %v300 = vpop.f32.mrf.mxu0
        %v301 = vadd.f32 %v214, %v300
        %302 = vmatprep.mubr.f32.mxu0 0.0
        %303 = vmatmul.mubr.f32.gmra.mxu0 %v230
        %v304 = vpop.f32.mrf.mxu0
        %v305 = vadd.f32 %v219, %v304
        %v306 = vpop.f32.mrf.mxu0
        %v307 = vadd.f32 %v219, %v306
        %308 = vdwg.mxu0
        %309 = vmatprep.subr.mxu0 0.0
        %310 = vmatpush1.msra.mxu0 0.0
        %311 = vmatprep.subr.mxu0 0.0
        %312 = vmatpush1.msra.mxu0 0.0
        %313 = vmatprep.subr.mxu0 0.0
        %314 = vmatpush1.msra.mxu0 0.0
        %315 = vmatprep.subr.mxu0 0.0
        %316 = vmatpush1.msra.mxu0 0.0
        %317 = vmatprep.subr.mxu0 0.0
        %318 = vmatpush1.msra.mxu0 0.0
        %319 = vmatprep.subr.mxu0 0.0
        %320 = vmatpush1.msra.mxu0 0.0
        %321 = vmatprep.subr.mxu0 0.0
        %322 = vmatpush1.msra.mxu0 0.0
        %323 = vmatprep.subr.mxu0 0.0
        %324 = vmatpush1.msra.mxu0 0.0
        %325 = vmatprep.subr.mxu0 0.0
        %326 = vmatpush1.msra.mxu0 0.0
        %327 = vmatprep.subr.mxu0 0.0
        %328 = vmatpush1.msra.mxu0 0.0
        %329 = vmatprep.subr.mxu0 0.0
        %330 = vmatpush1.msra.mxu0 0.0
        %331 = vmatprep.subr.mxu0 0.0
        %332 = vmatpush1.msra.mxu0 0.0
        %333 = vmatprep.subr.mxu0 0.0
        %334 = vmatpush1.msra.mxu0 0.0
        %335 = vmatprep.subr.mxu0 0.0
        %336 = vmatpush1.msra.mxu0 0.0
        %337 = vmatprep.subr.mxu0 0.0
        %338 = vmatpush1.msra.mxu0 0.0
        %339 = vmatprep.subr.mxu0 %v224
        %340 = vmatpush1.msra.mxu0 %v223
        %341 = vmatprep.subr.mxu0 0.0
        %342 = vmatpush2.msra.mxu0 0.0
        %343 = vmatprep.subr.mxu0 0.0
        %344 = vmatpush2.msra.mxu0 0.0
        %345 = vmatprep.subr.mxu0 0.0
        %346 = vmatpush2.msra.mxu0 0.0
        %347 = vmatprep.subr.mxu0 0.0
        %348 = vmatpush2.msra.mxu0 0.0
        %349 = vmatprep.subr.mxu0 0.0
        %350 = vmatpush2.msra.mxu0 0.0
        %351 = vmatprep.subr.mxu0 0.0
        %352 = vmatpush2.msra.mxu0 0.0
        %353 = vmatprep.subr.mxu0 0.0
        %354 = vmatpush2.msra.mxu0 0.0
        %355 = vmatprep.subr.mxu0 0.0
        %356 = vmatpush2.msra.mxu0 0.0
        %357 = vmatprep.subr.mxu0 0.0
        %358 = vmatpush2.msra.mxu0 0.0
        %359 = vmatprep.subr.mxu0 0.0
        %360 = vmatpush2.msra.mxu0 0.0
        %361 = vmatprep.subr.mxu0 0.0
        %362 = vmatpush2.msra.mxu0 0.0
        %363 = vmatprep.subr.mxu0 0.0
        %364 = vmatpush2.msra.mxu0 0.0
        %365 = vmatprep.subr.mxu0 0.0
        %366 = vmatpush2.msra.mxu0 0.0
        %367 = vmatprep.subr.mxu0 0.0
        %368 = vmatpush2.msra.mxu0 0.0
        %369 = vmatprep.subr.mxu0 0.0
        %370 = vmatpush2.msra.mxu0 0.0
        %371 = vmatprep.subr.mxu0 0.0
        %372 = vmatpush2.msra.mxu0 0.0
        %373 = vmatprep.mubr.f32.mxu0 0.0
        %374 = vmatmul.mubr.f32.gmra.mxu0 %v227
        %v375 = vpop.f32.mrf.mxu0
        %v376 = vadd.f32 %v214, %v375
        %v377 = vpop.f32.mrf.mxu0
        %v378 = vadd.f32 %v214, %v377
        %379 = vmatprep.mubr.f32.mxu0 0.0
        %380 = vmatmul.mubr.f32.gmra.mxu0 %v230
        %v381 = vpop.f32.mrf.mxu0
        %v382 = vadd.f32 %v219, %v381
        %v383 = vpop.f32.mrf.mxu0
        %v384 = vadd.f32 %v219, %v383
        %385 = vdwg.mxu0
        %v386 = vadd.f32 %v299, 3.0
        %v387 = vadd.f32 %v301, 3.0
        %v388 = vadd.f32 %v376, 3.0
        %v389 = vadd.f32 %v378, 3.0
        %v390 = vadd.f32 %v305, 3.0
        %v391 = vadd.f32 %v307, 3.0
        %v392 = vadd.f32 %v382, 3.0
        %v393 = vadd.f32 %v384, 3.0
        %v394 = vmax.f32 %v386, 0.0
        %v395 = vmax.f32 %v387, 0.0
        %v396 = vmax.f32 %v388, 0.0
        %v397 = vmax.f32 %v389, 0.0
        %v398 = vmax.f32 %v390, 0.0
        %v399 = vmax.f32 %v391, 0.0
        %v400 = vmax.f32 %v392, 0.0
        %v401 = vmax.f32 %v393, 0.0
        %v402 = vmin.f32 %v394, 6.0
        %v403 = vmin.f32 %v395, 6.0
        %v404 = vmin.f32 %v396, 6.0
        %v405 = vmin.f32 %v397, 6.0
        %v406 = vmin.f32 %v398, 6.0
        %v407 = vmin.f32 %v399, 6.0
        %v408 = vmin.f32 %v400, 6.0
        %v409 = vmin.f32 %v401, 6.0
        %v410 = vmul.f32 %v402, 0.16666667
        %v411 = vmul.f32 %v403, 0.16666667
        %v412 = vmul.f32 %v404, 0.16666667
        %v413 = vmul.f32 %v405, 0.16666667
        %v414 = vmul.f32 %v406, 0.16666667
        %v415 = vmul.f32 %v407, 0.16666667
        %v416 = vmul.f32 %v408, 0.16666667
        %v417 = vmul.f32 %v409, 0.16666667
        %v418 = vmul.f32 %v299, %v410
        %v419 = vmul.f32 %v301, %v411
        %v420 = vmul.f32 %v376, %v412
        %v421 = vmul.f32 %v378, %v413
        %v422 = vmul.f32 %v305, %v414
        %v423 = vmul.f32 %v307, %v415
        %v424 = vmul.f32 %v382, %v416
        %v425 = vmul.f32 %v384, %v417
        %426 = vst [vmem:[%s204] sm:$0xff] %v418
        %427 = vst [vmem:[%s204 + $0x8] sm:$0xff] %v419
        %428 = vst [vmem:[%s204 + $0x10] sm:$0xff] %v420
        %429 = vst [vmem:[%s204 + $0x18] sm:$0xff] %v421
        %430 = vst [vmem:[%s204 + $0x20] sm:$0xff] %v422
        %431 = vst [vmem:[%s204 + $0x28] sm:$0xff] %v423
        %432 = vst [vmem:[%s204 + $0x30] sm:$0xff] %v424
        %433 = vst [vmem:[%s204 + $0x38] sm:$0xff] %v425
        %s434 = sand.u32 %s112, 1
        %s435 = scalar_lea.sflag [#allocation4], %s434
        %s436 = sand.u32 %s112, 1
        %s437 = smul.addr %s436, 64
        %s438 = scalar_lea.vmem [#allocation5], %s437
        // Predicated region
        $region37: #{tpu_custom_call.1} parent=31 // pred_check
          %p439 = pneg %p122
        $region38: #{tpu_custom_call.1} parent=31 // pred_check_branch
          %441 = sbr.rel (%p439) target = $region40
        $region39: #{tpu_custom_call.1} parent=31 // pred_region
          %s442 = smul.u32 4, %s25
          %s444 = ssub.s32 1024, 1024
          %445 = vsyncadd %s435, %s444
          %s446 = smul.addr %s24, 8
          %s447 = sadd.s32 %s442, %s446
          %s448 = smul.addr %s447, 128
          %s449 = scalar_lea.hbm %s3, %s448
          %s450 = sshll.u32 %s438, 4
          %s451 = int_to_ptr.vmem [resolvable:$true] %s450
          %456 = dma.vmem_to_hbm [thread:$0]  %s451, 1024, %s449, %s435, 512, 512, 32
        $region40: #{tpu_custom_call.1} parent=31 // pred_fallthru
          _
      $region32: #{tpu_custom_call.1} parent=5 // pred_fallthru
        _
      %p457 = scmp.le.s32.totalorder 2, %s15
      // Predicated region
      $region41: #{tpu_custom_call.1} parent=5 // pred_check
        %p458 = pneg %p457
      $region42: #{tpu_custom_call.1} parent=5 // pred_check_branch
        %460 = sbr.rel (%p458) target = $region44
      $region43: #{tpu_custom_call.1} parent=5 // pred_region
        %s461 = ssub.s32 %s15, 2
        // Predicated region
        $region45: #{tpu_custom_call.1} parent=43 // pred_check
          %p462 = pneg %p128
        $region46: #{tpu_custom_call.1} parent=43 // pred_check_branch
          %464 = sbr.rel (%p462) target = $region48
        $region47: #{tpu_custom_call.1} parent=43 // pred_region
          %s465 = sand.u32 %s113, 1
          %s466 = scalar_lea.sflag [#allocation4], %s465
          %s467 = sand.u32 %s113, 1
          %s468 = smul.addr %s467, 64
          %s469 = scalar_lea.vmem [#allocation5], %s468
          %470 = dma.done %s466, 1024
        $region48: #{tpu_custom_call.1} parent=43 // pred_fallthru
          _
      $region44: #{tpu_custom_call.1} parent=5 // pred_fallthru
        _
    $region6: #{tpu_custom_call.1} parent=1 // loop_footer
      %s19 = sadd.s32 1, %s15
    $region7: #{tpu_custom_call.1} parent=1 // loop_footer_branch
      %14 = sbr.rel target = $region3
    $region8: #{tpu_custom_call.1} parent=1 // loop_exit
      _
    %471 = vsyncpa [#allocation3], 1
    %s472 = scalar_lea.sflag [#allocation3], 1
    %473 = vsyncpa %s472, 1
    %474 = vsyncpa [#allocation4], 1
    %s475 = scalar_lea.sflag [#allocation4], 1
    %476 = vsyncpa %s475, 1

</llo_original>
